<compile_context>
chip_gen: v7x
topology: tpu7x:2x2x1
jax: 0.10.0
libtpu: 0.0.40
codegen_flags: <defaults>
</compile_context>

<pallas_src>
import numpy as np
import jax
import jax.numpy as jnp
from jax.experimental import pallas as pl
from jax.experimental.pallas import tpu as pltpu

# ----------------------------- configuration --------------------------------
X_FEAT = 4           # X_num_features
Z_FEAT = 4           # Z_num_features
X_HID = 32           # X_hidden_units = [32]
Z_HID = 32           # Z_hidden_units = [32]
REPEATS = 2          # X_Z_pairs_repeats
XZ_HID = 8           # X_Z_hidden_units = [8]
PAIRS = X_FEAT * Z_FEAT          # X_Z_pairwise=True -> 16
XZ_UNITS = PAIRS * REPEATS       # X_Z_layer width = 32
N1 = X_HID + Z_HID + XZ_UNITS    # fused stage-1 width = 96
H_ALL = PAIRS * XZ_HID           # concatenated per-pair hidden width = 128
N2 = 2 + H_ALL                   # real stage-2 columns (out_x, out_z, h) = 130
N2P = 256                        # lane-padded stage-2 width (multiple of 128)

# packed-slab row offsets (8-aligned so in-kernel slices are sublane-aligned)
W1X_ROW, W1Z_ROW, B1_ROW = 0, 8, 16
S1_ROWS = 24                     # slab1: (24, 96)
W2_ROW, B2_ROW, W3_ROW = 0, N1, N1 + 8
S2_ROWS = W3_ROW + 8             # slab2: (112, 256)


# ------------------------------- Pallas kernel ------------------------------
def twinter_kernel(x_ref, z_ref, wpk1_ref, wpk2_ref, out_ref):
    f32 = jnp.float32

    # static, aligned slices of the two packed weight slabs (resident in VMEM)
    w1x = wpk1_ref[pl.ds(W1X_ROW, X_FEAT), :]        # (4, 96)
    w1z = wpk1_ref[pl.ds(W1Z_ROW, Z_FEAT), :]        # (4, 96)
    b1 = wpk1_ref[pl.ds(B1_ROW, 1), :]               # (1, 96)
    w2 = wpk2_ref[pl.ds(W2_ROW, N1), :]              # (96, 256)
    b2 = wpk2_ref[pl.ds(B2_ROW, 1), :]               # (1, 256)
    w3t = wpk2_ref[pl.ds(W3_ROW, 1), :]              # (1, 256)

    # Stage 1: fused X-hidden | Z-hidden | masked X_Z_layer, one 96-wide ReLU.
    # (x|z) concat is avoided by splitting the fused weight over the K halves.
    s1 = jnp.maximum(
        jnp.dot(x_ref[...], w1x, preferred_element_type=f32)
        + jnp.dot(z_ref[...], w1z, preferred_element_type=f32)
        + b1, 0.0)                                   # (B, 96)

    # Stage 2: block-diagonal head matmul -> [out_x, out_z, per-pair hidden, 0-pad]
    s2 = jnp.dot(s1, w2, preferred_element_type=f32) + b2   # (B, 256)

    # ReLU only on the per-pair hidden columns (>= 2); out_x/out_z pass through.
    lane = jax.lax.broadcasted_iota(jnp.int32, s2.shape, 1)
    a3 = jnp.where(lane < 2, s2, jnp.maximum(s2, 0.0))

    # Final fold: out = out_x + out_z + h @ w2f, emitted lane-dense as (1, B).
    out_ref[...] = jnp.dot(w3t, a3.T, preferred_element_type=f32)


# ------------------------------ parameter setup -----------------------------
def _linear(key, fan_in, fan_out, bias=True):
    """PyTorch-style uniform(-1/sqrt(fan_in), 1/sqrt(fan_in)) init, (in,out) layout."""
    bound = 1.0 / np.sqrt(fan_in)
    kw, kb = jax.random.split(key)
    w = jax.random.uniform(kw, (fan_in, fan_out), jnp.float32, -bound, bound)
    b = (jax.random.uniform(kb, (1, fan_out), jnp.float32, -bound, bound)
         if bias else None)
    return w, b


def _pairwise_mask(p, q, repeats):
    """Replicates Twinter_Net.create_mask (X_Z_pairwise=True). Shape (p*q*repeats, p+q)."""
    mask_x = np.zeros((p * q, p), dtype=np.float32)
    for i in range(p):
        mask_x[i * q:(i + 1) * q, i] = 1.0
    mask_z = np.vstack([np.eye(q, dtype=np.float32)] * p)
    mask = np.concatenate([mask_x, mask_z], axis=1)
    return np.repeat(mask, repeats, axis=0)


def init_raw_params(key):
    ks = jax.random.split(key, 5 + 2 * PAIRS)
    wx1, bx1 = _linear(ks[0], X_FEAT, X_HID)
    wx2, bx2 = _linear(ks[1], X_HID, 1)
    wz1, bz1 = _linear(ks[2], Z_FEAT, Z_HID)
    wz2, bz2 = _linear(ks[3], Z_HID, 1)

    # X_Z_layer, masked at init (weight stored (in, out) -> multiply by mask.T)
    wxz, bxz = _linear(ks[4], X_FEAT + Z_FEAT, XZ_UNITS)
    mask = jnp.asarray(_pairwise_mask(X_FEAT, Z_FEAT, REPEATS))  # (32, 8)
    wxz = wxz * mask.T

    # Parallel per-pair MLPs: [REPEATS, XZ_HID, 1], output layer has no bias.
    w1_list, b1_list, w2_list = [], [], []
    for p in range(PAIRS):
        w1, b1 = _linear(ks[5 + 2 * p], REPEATS, XZ_HID)
        w2, _ = _linear(ks[5 + 2 * p + 1], XZ_HID, 1, bias=False)
        w1_list.append(w1)
        b1_list.append(b1)
        w2_list.append(w2)

    return dict(wx1=wx1, bx1=bx1, wx2=wx2, bx2=bx2,
                wz1=wz1, bz1=bz1, wz2=wz2, bz2=bz2,
                wxz=wxz, bxz=bxz,
                w1_list=w1_list, b1_list=b1_list, w2_list=w2_list)


def pack_params(raw):
    """Build the two padded VMEM weight slabs consumed by the kernel."""
    f32 = jnp.float32

    # ---- stage 1: fused first layers, split over the (x | z) input halves ----
    w1x = jnp.concatenate([raw['wx1'],
                           jnp.zeros((X_FEAT, Z_HID), f32),
                           raw['wxz'][:X_FEAT, :]], axis=1)          # (4, 96)
    w1z = jnp.concatenate([jnp.zeros((Z_FEAT, X_HID), f32),
                           raw['wz1'],
                           raw['wxz'][X_FEAT:, :]], axis=1)          # (4, 96)
    b1 = jnp.concatenate([raw['bx1'], raw['bz1'], raw['bxz']], axis=1)  # (1, 96)

    wpk1 = jnp.zeros((S1_ROWS, N1), f32)
    wpk1 = wpk1.at[W1X_ROW:W1X_ROW + X_FEAT, :].set(w1x)
    wpk1 = wpk1.at[W1Z_ROW:W1Z_ROW + Z_FEAT, :].set(w1z)
    wpk1 = wpk1.at[B1_ROW:B1_ROW + 1, :].set(b1)

    # ---- stage 2: block-diag per-pair hidden layers + both scalar heads ----
    w1bd = jnp.zeros((XZ_UNITS, H_ALL), f32)
    for p in range(PAIRS):
        w1bd = w1bd.at[p * REPEATS:(p + 1) * REPEATS,
                       p * XZ_HID:(p + 1) * XZ_HID].set(raw['w1_list'][p])
    b1f = jnp.concatenate(raw['b1_list'], axis=1)       # (1, 128)
    w2f = jnp.concatenate(raw['w2_list'], axis=0)       # (128, 1)

    w2 = jnp.zeros((N1, N2P), f32)
    w2 = w2.at[0:X_HID, 0].set(raw['wx2'][:, 0])                      # -> col 0
    w2 = w2.at[X_HID:X_HID + Z_HID, 1].set(raw['wz2'][:, 0])          # -> col 1
    w2 = w2.at[X_HID + Z_HID:N1, 2:2 + H_ALL].set(w1bd)               # -> cols 2:130
    b2 = jnp.zeros((1, N2P), f32)
    b2 = b2.at[0, 0].set(raw['bx2'][0, 0])
    b2 = b2.at[0, 1].set(raw['bz2'][0, 0])
    b2 = b2.at[0, 2:2 + H_ALL].set(b1f[0])
    w3t = jnp.zeros((1, N2P), f32)
    w3t = w3t.at[0, 0].set(1.0)
    w3t = w3t.at[0, 1].set(1.0)
    w3t = w3t.at[0, 2:2 + H_ALL].set(w2f[:, 0])

    wpk2 = jnp.zeros((S2_ROWS, N2P), f32)
    wpk2 = wpk2.at[W2_ROW:W2_ROW + N1, :].set(w2)
    wpk2 = wpk2.at[B2_ROW:B2_ROW + 1, :].set(b2)
    wpk2 = wpk2.at[W3_ROW:W3_ROW + 1, :].set(w3t)
    return wpk1, wpk2


# --------------------------------- wrapper ----------------------------------
def twinter_forward_pallas(x, z, packed, tb=None):
    """Forward pass. tb=None or tb>=B -> single grid-less call; else batch-tiled."""
    wpk1, wpk2 = packed
    B = x.shape[0]

    if tb is None or tb >= B:
        # Tiny batch: whole arrays resident in VMEM, no grid/pipelining overhead.
        out_t = pl.pallas_call(
            twinter_kernel,
            out_shape=jax.ShapeDtypeStruct((1, B), jnp.float32),
        )(x, z, wpk1, wpk2)
    else:
        assert tb % 128 == 0 and B % tb == 0, \
            "batch tile must be a multiple of 128 that divides B"
        grid = (B // tb,)
        out_t = pl.pallas_call(
            twinter_kernel,
            out_shape=jax.ShapeDtypeStruct((1, B), jnp.float32),
            grid=grid,
            in_specs=[
                pl.BlockSpec((tb, x.shape[1]), lambda i: (i, 0)),
                pl.BlockSpec((tb, z.shape[1]), lambda i: (i, 0)),
                pl.BlockSpec(wpk1.shape, lambda i: (0, 0)),   # weights stay resident
                pl.BlockSpec(wpk2.shape, lambda i: (0, 0)),
            ],
            out_specs=pl.BlockSpec((1, tb), lambda i: (0, i)),
            compiler_params=pltpu.CompilerParams(
                dimension_semantics=("parallel",)),
        )(x, z, wpk1, wpk2)

    # lane-dense (1, B) -> (B, 1); free reshape (one dim is 1).
    return out_t.reshape(B, 1)
    # TODO(synk): task_type='classification' would add a sigmoid here; config is regression.


# ------------------------- pure-JAX reference (check) ------------------------
def twinter_forward_ref(x, z, raw):
    relu = lambda a: jnp.maximum(a, 0.0)
    out_x = relu(x @ raw['wx1'] + raw['bx1']) @ raw['wx2'] + raw['bx2']
    out_z = relu(z @ raw['wz1'] + raw['bz1']) @ raw['wz2'] + raw['bz2']
    xz = jnp.concatenate([x, z], axis=1)
    xz_layer = relu(xz @ raw['wxz'] + raw['bxz'])
    out_xz = jnp.zeros((x.shape[0], 1), jnp.float32)
    for p in range(PAIRS):          # mirrors forward_X_Z_nets loop exactly
        cols = xz_layer[:, p * REPEATS:(p + 1) * REPEATS]
        h = relu(cols @ raw['w1_list'][p] + raw['b1_list'][p])
        out_xz = out_xz + h @ raw['w2_list'][p]
    return out_x + out_z + out_xz


# ----------------------------------- main ------------------------------------
if __name__ == "__main__":
    key = jax.random.PRNGKey(0)
    kp, kx, kz, kx2, kz2 = jax.random.split(key, 5)

    raw = init_raw_params(kp)
    packed = pack_params(raw)

    # 1) small batch -> grid-less whole-array path
    B1 = 8
    x1 = jax.random.normal(kx, (B1, X_FEAT), jnp.float32)
    z1 = jax.random.normal(kz, (B1, Z_FEAT), jnp.float32)
    out1 = jax.block_until_ready(twinter_forward_pallas(x1, z1, packed))
    ref1 = twinter_forward_ref(x1, z1, raw)
    assert out1.shape == (B1, 1)
    assert jnp.allclose(out1, ref1, atol=1e-4, rtol=1e-4), (out1, ref1)

    # 2) larger batch -> batch-tiled grid (TB=128, weights resident, parallel axis)
    B2 = 256
    x2 = jax.random.normal(kx2, (B2, X_FEAT), jnp.float32)
    z2 = jax.random.normal(kz2, (B2, Z_FEAT), jnp.float32)
    out2 = jax.block_until_ready(twinter_forward_pallas(x2, z2, packed, tb=128))
    ref2 = twinter_forward_ref(x2, z2, raw)
    assert out2.shape == (B2, 1)
    assert jnp.allclose(out2, ref2, atol=1e-4, rtol=1e-4), (out2, ref2)

    print("KERNEL_OK")
</pallas_src>

<mosaic_0001>
module attributes {stable_mosaic.version = 11 : i64} {
  func.func @twinter_kernel(%arg0: memref<8x4xf32, #tpu.memory_space<vmem>>, %arg1: memref<8x4xf32, #tpu.memory_space<vmem>>, %arg2: memref<24x96xf32, #tpu.memory_space<vmem>>, %arg3: memref<112x256xf32, #tpu.memory_space<vmem>>, %arg4: memref<1x8xf32, #tpu.memory_space<vmem>>) attributes {dimension_semantics = [], scalar_prefetch = 0 : i64, scratch_operands = 0 : i64, tpu.core_type = #tpu.core_type<tc>} {
    %c0 = arith.constant 0 : index
    %c0_0 = arith.constant 0 : index
    %0 = vector.load %arg2[%c0, %c0_0] : memref<24x96xf32, #tpu.memory_space<vmem>>, vector<4x96xf32>
    %c8 = arith.constant 8 : index
    %c0_1 = arith.constant 0 : index
    %1 = vector.load %arg2[%c8, %c0_1] : memref<24x96xf32, #tpu.memory_space<vmem>>, vector<4x96xf32>
    %c16 = arith.constant 16 : index
    %c0_2 = arith.constant 0 : index
    %2 = vector.load %arg2[%c16, %c0_2] : memref<24x96xf32, #tpu.memory_space<vmem>>, vector<1x96xf32>
    %c0_3 = arith.constant 0 : index
    %c0_4 = arith.constant 0 : index
    %3 = vector.load %arg3[%c0_3, %c0_4] : memref<112x256xf32, #tpu.memory_space<vmem>>, vector<96x256xf32>
    %c96 = arith.constant 96 : index
    %c0_5 = arith.constant 0 : index
    %4 = vector.load %arg3[%c96, %c0_5] : memref<112x256xf32, #tpu.memory_space<vmem>>, vector<1x256xf32>
    %c104 = arith.constant 104 : index
    %c0_6 = arith.constant 0 : index
    %5 = vector.load %arg3[%c104, %c0_6] : memref<112x256xf32, #tpu.memory_space<vmem>>, vector<1x256xf32>
    %c0_7 = arith.constant 0 : index
    %c0_8 = arith.constant 0 : index
    %6 = vector.load %arg0[%c0_7, %c0_8] : memref<8x4xf32, #tpu.memory_space<vmem>>, vector<8x4xf32>
    %cst = arith.constant dense<0.000000e+00> : vector<8x96xf32>
    %7 = tpu.matmul %6, %0, %cst {dimension_numbers = #tpu.dot_dimension_numbers<[1], [0], [0], [1], [0, 0, 1, 1], [], []>} : vector<8x4xf32>, vector<4x96xf32>, vector<8x96xf32> -> vector<8x96xf32>
    %c0_9 = arith.constant 0 : index
    %c0_10 = arith.constant 0 : index
    %8 = vector.load %arg1[%c0_9, %c0_10] : memref<8x4xf32, #tpu.memory_space<vmem>>, vector<8x4xf32>
    %cst_11 = arith.constant dense<0.000000e+00> : vector<8x96xf32>
    %9 = tpu.matmul %8, %1, %cst_11 {dimension_numbers = #tpu.dot_dimension_numbers<[1], [0], [0], [1], [0, 0, 1, 1], [], []>} : vector<8x4xf32>, vector<4x96xf32>, vector<8x96xf32> -> vector<8x96xf32>
    %10 = arith.addf %7, %9 : vector<8x96xf32>
    %11 = vector.broadcast %2 : vector<1x96xf32> to vector<8x96xf32>
    %12 = arith.addf %10, %11 : vector<8x96xf32>
    %cst_12 = arith.constant 0.000000e+00 : f32
    %13 = vector.broadcast %cst_12 : f32 to vector<8x96xf32>
    %14 = arith.maximumf %12, %13 : vector<8x96xf32>
    %cst_13 = arith.constant dense<0.000000e+00> : vector<8x256xf32>
    %15 = tpu.matmul %14, %3, %cst_13 {dimension_numbers = #tpu.dot_dimension_numbers<[1], [0], [0], [1], [0, 0, 1, 1], [], []>} : vector<8x96xf32>, vector<96x256xf32>, vector<8x256xf32> -> vector<8x256xf32>
    %16 = vector.broadcast %4 : vector<1x256xf32> to vector<8x256xf32>
    %17 = arith.addf %15, %16 : vector<8x256xf32>
    %18 = tpu.iota {dimensions = array<i32: 1>} : vector<8x256xi32>
    %c2_i32 = arith.constant 2 : i32
    %19 = vector.broadcast %c2_i32 : i32 to vector<8x256xi32>
    %20 = arith.cmpi slt, %18, %19 : vector<8x256xi32>
    %cst_14 = arith.constant 0.000000e+00 : f32
    %21 = vector.broadcast %cst_14 : f32 to vector<8x256xf32>
    %22 = arith.maximumf %17, %21 : vector<8x256xf32>
    %23 = arith.select %20, %17, %22 : vector<8x256xi1>, vector<8x256xf32>
    %24 = tpu.transpose %23, [1, 0] : vector<8x256xf32> -> vector<256x8xf32>
    %cst_15 = arith.constant dense<0.000000e+00> : vector<1x8xf32>
    %25 = tpu.matmul %5, %24, %cst_15 {dimension_numbers = #tpu.dot_dimension_numbers<[1], [0], [0], [1], [0, 0, 1, 1], [], []>} : vector<1x256xf32>, vector<256x8xf32>, vector<1x8xf32> -> vector<1x8xf32>
    %c0_16 = arith.constant 0 : index
    %c0_17 = arith.constant 0 : index
    %26 = vector.load %arg4[%c0_16, %c0_17] : memref<1x8xf32, #tpu.memory_space<vmem>>, vector<1x8xf32>
    tpu.vector_store %arg4[%c0_16, %c0_17], %25 {strides = array<i32>} : memref<1x8xf32, #tpu.memory_space<vmem>>, vector<1x8xf32>,
    return
  }
}

</mosaic_0001>

<llo_original>
// kernel: tpu_custom_call.1
$region0: #{tpu_custom_call.1}
  #allocation0 [shape = 'u32[]', space=smem, size = 0x4, offset = 0x4, fixed_abs, tag = 'smem constant byte address 0x4 - core index']
  #allocation1 [shape = 'u32[144,128]{1,0:T(1,128)}', space=vmem, size = 0x12000, scoped, tag = 'internal scratch']
  %s0 = inlined_call_operand.vmem [shape: f32[8,4], index: 0, kind: input, shape index: {}]
  %s1 = inlined_call_operand.vmem [shape: f32[8,4], index: 1, kind: input, shape index: {}]
  %s2 = inlined_call_operand.vmem [shape: f32[24,96], index: 2, kind: input, shape index: {}]
  %s3 = inlined_call_operand.hbm [shape: f32[112,256], index: 3, kind: input, shape index: {}]
  %s4 = inlined_call_operand.hbm [shape: f32[1,8], index: 4, kind: output, shape index: {}]
  %s5 = sld [smem:[#allocation0]]
  $region30: #{tpu_custom_call.1} parent=0
    _
  %s7 = ssub.s32 1, %s5
  %s8 = scalar_select 0, %s7, %s5
  $region1: #{tpu_custom_call.1} parent=0
    #allocation2 [shape = 'u8[114688]{0}', space=vmem, size = 0x1c000, scoped, tag = 'input window, operand 3, single buffered']
    #allocation3 [shape = 's32[1]{0}', space=sflag, size = 0x4, scoped, tag = 'scoped memory for tpu_custom_call.1']
    #allocation4 [shape = 's32[1]{0}', space=sflag, size = 0x4, scoped, tag = 'scoped memory for tpu_custom_call.1']
    #allocation5 [shape = 'u8[512]{0}', space=vmem, size = 0x400, scoped, tag = 'output window, operand 0, single buffered']
    %9 = vsyncpa [#allocation3], 0
    %10 = vsyncpa [#allocation4], 0
    // Predicated region
    $region2: #{tpu_custom_call.1} parent=1 // pred_check
      _
    $region3: #{tpu_custom_call.1} parent=1 // pred_check_branch
      %12 = sbr.rel (0) target = $region5
    $region4: #{tpu_custom_call.1} parent=1 // pred_region
      _
    $region5: #{tpu_custom_call.1} parent=1 // pred_fallthru
      _
    // Predicated region
    $region6: #{tpu_custom_call.1} parent=1 // pred_check
      _
    $region7: #{tpu_custom_call.1} parent=1 // pred_check_branch
      %14 = sbr.rel (0) target = $region9
    $region8: #{tpu_custom_call.1} parent=1 // pred_region
      _
    $region9: #{tpu_custom_call.1} parent=1 // pred_fallthru
      _
    // Predicated region
    $region10: #{tpu_custom_call.1} parent=1 // pred_check
      _
    $region11: #{tpu_custom_call.1} parent=1 // pred_check_branch
      %16 = sbr.rel (0) target = $region13
    $region12: #{tpu_custom_call.1} parent=1 // pred_region
      _
    $region13: #{tpu_custom_call.1} parent=1 // pred_fallthru
      _
    // Predicated region
    $region14: #{tpu_custom_call.1} parent=1 // pred_check
      _
    $region15: #{tpu_custom_call.1} parent=1 // pred_check_branch
      %18 = sbr.rel (0) target = $region17
    $region16: #{tpu_custom_call.1} parent=1 // pred_region
      %s20 = ssub.s32 3584, 3584
      %21 = vsyncadd [#allocation3], %s20
      %s22 = sshll.u32 [#allocation2], 4
      %s23 = int_to_ptr.vmem [resolvable:$true] %s22
      %28 = dma.hbm_to_vmem [thread:$0]  %s3, 3584, %s23, [#allocation3], 256, 256, 16
    $region17: #{tpu_custom_call.1} parent=1 // pred_fallthru
      _
    // Predicated region
    $region18: #{tpu_custom_call.1} parent=1 // pred_check
      _
    $region19: #{tpu_custom_call.1} parent=1 // pred_check_branch
      %30 = sbr.rel (0) target = $region21
    $region20: #{tpu_custom_call.1} parent=1 // pred_region
      %31 = dma.done [#allocation3], 3584
    $region21: #{tpu_custom_call.1} parent=1 // pred_fallthru
      _
    %v32 = vld [vmem:[%s2] sm:$0xf]
    %v33 = vld [vmem:[%s2 + $0x8] sm:$0xf]
    %v34 = vld [vmem:[%s2 + $0x10] sm:$0x1]
    %v35 = vld [vmem:[#allocation2] sm:$0xff]
    %v36 = vld [vmem:[#allocation2 + $0x8] sm:$0xff]
    %v37 = vld [vmem:[#allocation2 + $0x10] sm:$0xff]
    %v38 = vld [vmem:[#allocation2 + $0x18] sm:$0xff]
    %v39 = vld [vmem:[#allocation2 + $0x20] sm:$0xff]
    %v40 = vld [vmem:[#allocation2 + $0x28] sm:$0xff]
    %v41 = vld [vmem:[#allocation2 + $0x30] sm:$0xff]
    %v42 = vld [vmem:[#allocation2 + $0x38] sm:$0xff]
    %v43 = vld [vmem:[#allocation2 + $0x40] sm:$0xff]
    %v44 = vld [vmem:[#allocation2 + $0x48] sm:$0xff]
    %v45 = vld [vmem:[#allocation2 + $0x50] sm:$0xff]
    %v46 = vld [vmem:[#allocation2 + $0x58] sm:$0xff]
    %v47 = vld [vmem:[#allocation2 + $0x60] sm:$0xff]
    %v48 = vld [vmem:[#allocation2 + $0x68] sm:$0xff]
    %v49 = vld [vmem:[#allocation2 + $0x70] sm:$0xff]
    %v50 = vld [vmem:[#allocation2 + $0x78] sm:$0xff]
    %v51 = vld [vmem:[#allocation2 + $0x80] sm:$0xff]
    %v52 = vld [vmem:[#allocation2 + $0x88] sm:$0xff]
    %v53 = vld [vmem:[#allocation2 + $0x90] sm:$0xff]
    %v54 = vld [vmem:[#allocation2 + $0x98] sm:$0xff]
    %v55 = vld [vmem:[#allocation2 + $0xa0] sm:$0xff]
    %v56 = vld [vmem:[#allocation2 + $0xa8] sm:$0xff]
    %v57 = vld [vmem:[#allocation2 + $0xb0] sm:$0xff]
    %v58 = vld [vmem:[#allocation2 + $0xb8] sm:$0xff]
    %s59 = scalar_lea.vmem [#allocation2], 192
    %v60 = vld [vmem:[%s59] ss:$8 sm:$0x3]
    %s61 = scalar_lea.vmem [#allocation2], 208
    %v62 = vld [vmem:[%s61] ss:$8 sm:$0x3]
    %v63 = vld [vmem:[%s0] sm:$0xff]
    %v64 = vld [vmem:[%s1] sm:$0xff]
    %vm65 = vcmask 31744
    %v67 = vsel %vm65, %v64, 0
    %vm69 = vcmask 1043456
    %v71 = vsel %vm69, %v33, 0
    %73 = vmatprep.subr.mxu0 0.0
    %74 = vmatpush1.msra.mxu0 %v71
    %75 = vmatprep.subr.mxu0 0.0
    %76 = vmatpush1.msra.mxu0 0.0
    %77 = vmatprep.subr.mxu0 0.0
    %78 = vmatpush1.msra.mxu0 0.0
    %79 = vmatprep.subr.mxu0 0.0
    %80 = vmatpush1.msra.mxu0 0.0
    %81 = vmatprep.subr.mxu0 0.0
    %82 = vmatpush1.msra.mxu0 0.0
    %83 = vmatprep.subr.mxu0 0.0
    %84 = vmatpush1.msra.mxu0 0.0
    %85 = vmatprep.subr.mxu0 0.0
    %86 = vmatpush1.msra.mxu0 0.0
    %87 = vmatprep.subr.mxu0 0.0
    %88 = vmatpush1.msra.mxu0 0.0
    %89 = vmatprep.subr.mxu0 0.0
    %90 = vmatpush1.msra.mxu0 0.0
    %91 = vmatprep.subr.mxu0 0.0
    %92 = vmatpush1.msra.mxu0 0.0
    %93 = vmatprep.subr.mxu0 0.0
    %94 = vmatpush1.msra.mxu0 0.0
    %95 = vmatprep.subr.mxu0 0.0
    %96 = vmatpush1.msra.mxu0 0.0
    %97 = vmatprep.subr.mxu0 0.0
    %98 = vmatpush1.msra.mxu0 0.0
    %99 = vmatprep.subr.mxu0 0.0
    %100 = vmatpush1.msra.mxu0 0.0
    %101 = vmatprep.subr.mxu0 0.0
    %102 = vmatpush1.msra.mxu0 0.0
    %103 = vmatprep.subr.mxu0 0.0
    %104 = vmatpush1.msra.mxu0 0.0
    %105 = vmatprep.subr.mxu0 0.0
    %106 = vmatpush1.msra.mxu0 0.0
    %107 = vmatprep.subr.mxu0 0.0
    %108 = vmatpush1.msra.mxu0 0.0
    %109 = vmatprep.subr.mxu0 0.0
    %110 = vmatpush1.msra.mxu0 0.0
    %111 = vmatprep.subr.mxu0 0.0
    %112 = vmatpush1.msra.mxu0 0.0
    %113 = vmatprep.subr.mxu0 0.0
    %114 = vmatpush1.msra.mxu0 0.0
    %115 = vmatprep.subr.mxu0 0.0
    %116 = vmatpush1.msra.mxu0 0.0
    %117 = vmatprep.subr.mxu0 0.0
    %118 = vmatpush1.msra.mxu0 0.0
    %119 = vmatprep.subr.mxu0 0.0
    %120 = vmatpush1.msra.mxu0 0.0
    %121 = vmatprep.subr.mxu0 0.0
    %122 = vmatpush1.msra.mxu0 0.0
    %123 = vmatprep.subr.mxu0 0.0
    %124 = vmatpush1.msra.mxu0 0.0
    %125 = vmatprep.subr.mxu0 0.0
    %126 = vmatpush1.msra.mxu0 0.0
    %127 = vmatprep.subr.mxu0 0.0
    %128 = vmatpush1.msra.mxu0 0.0
    %129 = vmatprep.subr.mxu0 0.0
    %130 = vmatpush1.msra.mxu0 0.0
    %131 = vmatprep.subr.mxu0 0.0
    %132 = vmatpush1.msra.mxu0 0.0
    %133 = vmatprep.subr.mxu0 0.0
    %134 = vmatpush1.msra.mxu0 0.0
    %135 = vmatprep.subr.mxu0 0.0
    %136 = vmatpush1.msra.mxu0 0.0
    %137 = vmatprep.mubr.f32.mxu0 0.0
    %138 = vmatmul.mubr.f32.gmra.mrb[0].mxu0 %v67
    %v139 = vpop.f32.mrb[0].mxu0
    %v140 = vadd.f32 0.0, %v139
    %v141 = vpop.f32.mrb[0].mxu0
    %142 = vdwg.mxu0
    %v144 = vsel %vm65, %v63, 0
    %v147 = vsel %vm69, %v32, 0
    %149 = vmatprep.subr.mxu0 0.0
    %150 = vmatpush1.msra.mxu0 %v147
    %151 = vmatprep.subr.mxu0 0.0
    %152 = vmatpush1.msra.mxu0 0.0
    %153 = vmatprep.subr.mxu0 0.0
    %154 = vmatpush1.msra.mxu0 0.0
    %155 = vmatprep.subr.mxu0 0.0
    %156 = vmatpush1.msra.mxu0 0.0
    %157 = vmatprep.subr.mxu0 0.0
    %158 = vmatpush1.msra.mxu0 0.0
    %159 = vmatprep.subr.mxu0 0.0
    %160 = vmatpush1.msra.mxu0 0.0
    %161 = vmatprep.subr.mxu0 0.0
    %162 = vmatpush1.msra.mxu0 0.0
    %163 = vmatprep.subr.mxu0 0.0
    %164 = vmatpush1.msra.mxu0 0.0
    %165 = vmatprep.subr.mxu0 0.0
    %166 = vmatpush1.msra.mxu0 0.0
    %167 = vmatprep.subr.mxu0 0.0
    %168 = vmatpush1.msra.mxu0 0.0
    %169 = vmatprep.subr.mxu0 0.0
    %170 = vmatpush1.msra.mxu0 0.0
    %171 = vmatprep.subr.mxu0 0.0
    %172 = vmatpush1.msra.mxu0 0.0
    %173 = vmatprep.subr.mxu0 0.0
    %174 = vmatpush1.msra.mxu0 0.0
    %175 = vmatprep.subr.mxu0 0.0
    %176 = vmatpush1.msra.mxu0 0.0
    %177 = vmatprep.subr.mxu0 0.0
    %178 = vmatpush1.msra.mxu0 0.0
    %179 = vmatprep.subr.mxu0 0.0
    %180 = vmatpush1.msra.mxu0 0.0
    %181 = vmatprep.subr.mxu0 0.0
    %182 = vmatpush1.msra.mxu0 0.0
    %183 = vmatprep.subr.mxu0 0.0
    %184 = vmatpush1.msra.mxu0 0.0
    %185 = vmatprep.subr.mxu0 0.0
    %186 = vmatpush1.msra.mxu0 0.0
    %187 = vmatprep.subr.mxu0 0.0
    %188 = vmatpush1.msra.mxu0 0.0
    %189 = vmatprep.subr.mxu0 0.0
    %190 = vmatpush1.msra.mxu0 0.0
    %191 = vmatprep.subr.mxu0 0.0
    %192 = vmatpush1.msra.mxu0 0.0
    %193 = vmatprep.subr.mxu0 0.0
    %194 = vmatpush1.msra.mxu0 0.0
    %195 = vmatprep.subr.mxu0 0.0
    %196 = vmatpush1.msra.mxu0 0.0
    %197 = vmatprep.subr.mxu0 0.0
    %198 = vmatpush1.msra.mxu0 0.0
    %199 = vmatprep.subr.mxu0 0.0
    %200 = vmatpush1.msra.mxu0 0.0
    %201 = vmatprep.subr.mxu0 0.0
    %202 = vmatpush1.msra.mxu0 0.0
    %203 = vmatprep.subr.mxu0 0.0
    %204 = vmatpush1.msra.mxu0 0.0
    %205 = vmatprep.subr.mxu0 0.0
    %206 = vmatpush1.msra.mxu0 0.0
    %207 = vmatprep.subr.mxu0 0.0
    %208 = vmatpush1.msra.mxu0 0.0
    %209 = vmatprep.subr.mxu0 0.0
    %210 = vmatpush1.msra.mxu0 0.0
    %211 = vmatprep.subr.mxu0 0.0
    %212 = vmatpush1.msra.mxu0 0.0
    %213 = vmatprep.mubr.f32.mxu0 0.0
    %214 = vmatmul.mubr.f32.gmra.mrb[0].mxu0 %v144
    %v215 = vpop.f32.mrb[0].mxu0
    %v216 = vadd.f32 %v140, %v215
    %v217 = vpop.f32.mrb[0].mxu0
    %218 = vdwg.mxu0
    %v219 = vlaneseq
    %v220 = vshrl.u32 %v219, 7
    %v221 = vsub.s32 0, %v220
    %v222 = vrot.slane %v34, %v221
    %v223 = vadd.f32 %v216, %v222
    %v224 = vmax.f32 %v223, 0.0
    %v226 = vlaneseq
    %v227 = vshrl.u32 %v226, 7
    %v228 = vsub.s32 0, %v227
    %v229 = vrot.slane %v60, %v228
    %v230 = vlaneseq
    %v231 = vshrl.u32 %v230, 7
    %v232 = vsub.s32 1, %v231
    %v233 = vrot.slane %v60, %v232
    %vm236 = vcmask 785408
    %v238 = vsel %vm236, %v224, 0
    %240 = vmatprep.subr.mxu0 %v36
    %241 = vmatpush1.msra.mxu0 %v35
    %242 = vmatprep.subr.mxu0 %v38
    %243 = vmatpush1.msra.mxu0 %v37
    %244 = vmatprep.subr.mxu0 %v40
    %245 = vmatpush1.msra.mxu0 %v39
    %246 = vmatprep.subr.mxu0 %v42
    %247 = vmatpush1.msra.mxu0 %v41
    %248 = vmatprep.subr.mxu0 %v44
    %249 = vmatpush1.msra.mxu0 %v43
    %250 = vmatprep.subr.mxu0 %v46
    %251 = vmatpush1.msra.mxu0 %v45
    %252 = vmatprep.subr.mxu0 %v48
    %253 = vmatpush1.msra.mxu0 %v47
    %254 = vmatprep.subr.mxu0 %v50
    %255 = vmatpush1.msra.mxu0 %v49
    %256 = vmatprep.subr.mxu0 %v52
    %257 = vmatpush1.msra.mxu0 %v51
    %258 = vmatprep.subr.mxu0 %v54
    %259 = vmatpush1.msra.mxu0 %v53
    %260 = vmatprep.subr.mxu0 %v56
    %261 = vmatpush1.msra.mxu0 %v55
    %262 = vmatprep.subr.mxu0 %v58
    %263 = vmatpush1.msra.mxu0 %v57
    %264 = vmatprep.subr.mxu0 0.0
    %265 = vmatpush1.msra.mxu0 0.0
    %266 = vmatprep.subr.mxu0 0.0
    %267 = vmatpush1.msra.mxu0 0.0
    %268 = vmatprep.subr.mxu0 0.0
    %269 = vmatpush1.msra.mxu0 0.0
    %270 = vmatprep.subr.mxu0 0.0
    %271 = vmatpush1.msra.mxu0 0.0
    %272 = vmatprep.subr.mxu0 0.0
    %273 = vmatpush1.msra.mxu0 0.0
    %274 = vmatprep.subr.mxu0 0.0
    %275 = vmatpush1.msra.mxu0 0.0
    %276 = vmatprep.subr.mxu0 0.0
    %277 = vmatpush1.msra.mxu0 0.0
    %278 = vmatprep.subr.mxu0 0.0
    %279 = vmatpush1.msra.mxu0 0.0
    %280 = vmatprep.subr.mxu0 0.0
    %281 = vmatpush1.msra.mxu0 0.0
    %282 = vmatprep.subr.mxu0 0.0
    %283 = vmatpush1.msra.mxu0 0.0
    %284 = vmatprep.subr.mxu0 0.0
    %285 = vmatpush1.msra.mxu0 0.0
    %286 = vmatprep.subr.mxu0 0.0
    %287 = vmatpush1.msra.mxu0 0.0
    %288 = vmatprep.subr.mxu0 0.0
    %289 = vmatpush1.msra.mxu0 0.0
    %290 = vmatprep.subr.mxu0 0.0
    %291 = vmatpush1.msra.mxu0 0.0
    %292 = vmatprep.subr.mxu0 0.0
    %293 = vmatpush1.msra.mxu0 0.0
    %294 = vmatprep.subr.mxu0 0.0
    %295 = vmatpush1.msra.mxu0 0.0
    %296 = vmatprep.subr.mxu0 0.0
    %297 = vmatpush1.msra.mxu0 0.0
    %298 = vmatprep.subr.mxu0 0.0
    %299 = vmatpush1.msra.mxu0 0.0
    %300 = vmatprep.subr.mxu0 0.0
    %301 = vmatpush1.msra.mxu0 0.0
    %302 = vmatprep.subr.mxu0 0.0
    %303 = vmatpush1.msra.mxu0 0.0
    %304 = vmatprep.mubr.f32.mxu0 0.0
    %305 = vmatmul.mubr.f32.gmra.mrb[0].mxu0 %v238
    %v306 = vpop.f32.mrb[0].mxu0
    %v307 = vadd.f32 %v229, %v306
    %v308 = vpop.f32.mrb[0].mxu0
    %v309 = vadd.f32 %v233, %v308
    %310 = vdwg.mxu0
    %v311 = vlaneseq
    %v312 = vand.u32 %v311, 127
    %v313 = vadd.s32 %v312, 128
    %vm314 = vcmp.lt.s32.totalorder %v312, 2
    %vm315 = vcmp.lt.s32.totalorder %v313, 2
    %v316 = vmax.f32 %v307, 0.0
    %v317 = vmax.f32 %v309, 0.0
    %v318 = vsel %vm314, %v307, %v316
    %v319 = vsel %vm315, %v309, %v317
    %v321 = vlaneseq
    %v322 = vshrl.u32 %v321, 7
    %v323 = vsub.s32 0, %v322
    %v324 = vrot.slane %v62, %v323
    %v325 = vlaneseq
    %v326 = vshrl.u32 %v325, 7
    %v327 = vsub.s32 1, %v326
    %v328 = vrot.slane %v62, %v327
    %331 = vmatprep.subr.mxu0 %v319
    %332 = vmatpush1.xpose.msra.mxu0 %v318
    %333 = vmatprep.subr.mxu0 0.0
    %334 = vmatpush1.xpose.msra.mxu0 0.0
    %335 = vmatprep.subr.mxu0 0.0
    %336 = vmatpush1.xpose.msra.mxu0 0.0
    %337 = vmatprep.subr.mxu0 0.0
    %338 = vmatpush1.xpose.msra.mxu0 0.0
    %339 = vmatprep.subr.mxu0 0.0
    %340 = vmatpush1.xpose.msra.mxu0 0.0
    %341 = vmatprep.subr.mxu0 0.0
    %342 = vmatpush1.xpose.msra.mxu0 0.0
    %343 = vmatprep.subr.mxu0 0.0
    %344 = vmatpush1.xpose.msra.mxu0 0.0
    %345 = vmatprep.subr.mxu0 0.0
    %346 = vmatpush1.xpose.msra.mxu0 0.0
    %347 = vmatprep.subr.mxu0 0.0
    %348 = vmatpush1.xpose.msra.mxu0 0.0
    %349 = vmatprep.subr.mxu0 0.0
    %350 = vmatpush1.xpose.msra.mxu0 0.0
    %351 = vmatprep.subr.mxu0 0.0
    %352 = vmatpush1.xpose.msra.mxu0 0.0
    %353 = vmatprep.subr.mxu0 0.0
    %354 = vmatpush1.xpose.msra.mxu0 0.0
    %355 = vmatprep.subr.mxu0 0.0
    %356 = vmatpush1.xpose.msra.mxu0 0.0
    %357 = vmatprep.subr.mxu0 0.0
    %358 = vmatpush1.xpose.msra.mxu0 0.0
    %359 = vmatprep.subr.mxu0 0.0
    %360 = vmatpush1.xpose.msra.mxu0 0.0
    %361 = vmatprep.subr.mxu0 0.0
    %362 = vmatpush1.xpose.msra.mxu0 0.0
    %363 = vmatprep.subr.mxu0 0.0
    %364 = vmatpush1.xpose.msra.mxu0 0.0
    %365 = vmatprep.subr.mxu0 0.0
    %366 = vmatpush1.xpose.msra.mxu0 0.0
    %367 = vmatprep.subr.mxu0 0.0
    %368 = vmatpush1.xpose.msra.mxu0 0.0
    %369 = vmatprep.subr.mxu0 0.0
    %370 = vmatpush1.xpose.msra.mxu0 0.0
    %371 = vmatprep.subr.mxu0 0.0
    %372 = vmatpush1.xpose.msra.mxu0 0.0
    %373 = vmatprep.subr.mxu0 0.0
    %374 = vmatpush1.xpose.msra.mxu0 0.0
    %375 = vmatprep.subr.mxu0 0.0
    %376 = vmatpush1.xpose.msra.mxu0 0.0
    %377 = vmatprep.subr.mxu0 0.0
    %378 = vmatpush1.xpose.msra.mxu0 0.0
    %379 = vmatprep.subr.mxu0 0.0
    %380 = vmatpush1.xpose.msra.mxu0 0.0
    %381 = vmatprep.subr.mxu0 0.0
    %382 = vmatpush1.xpose.msra.mxu0 0.0
    %383 = vmatprep.subr.mxu0 0.0
    %384 = vmatpush1.xpose.msra.mxu0 0.0
    %385 = vmatprep.subr.mxu0 0.0
    %386 = vmatpush1.xpose.msra.mxu0 0.0
    %387 = vmatprep.subr.mxu0 0.0
    %388 = vmatpush1.xpose.msra.mxu0 0.0
    %389 = vmatprep.subr.mxu0 0.0
    %390 = vmatpush1.xpose.msra.mxu0 0.0
    %391 = vmatprep.subr.mxu0 0.0
    %392 = vmatpush1.xpose.msra.mxu0 0.0
    %393 = vmatprep.subr.mxu0 0.0
    %394 = vmatpush1.xpose.msra.mxu0 0.0
    %395 = vmatprep.mubr.f32.mxu0 %v328
    %396 = vmatmul.mubr.f32.gmra.mrb[0].mxu0 %v324
    %v397 = vpop.f32.mrb[0].mxu0
    %v398 = vadd.f32 0.0, %v397
    %v399 = vpop.f32.mrb[0].mxu0
    %400 = vdwg.mxu0
    %vm401 = vcmask 57344
    %402 = vst.msk [vmem:[#allocation5] sm:$0x1] %vm401, %v398
    // Predicated region
    $region22: #{tpu_custom_call.1} parent=1 // pred_check
      _
    $region23: #{tpu_custom_call.1} parent=1 // pred_check_branch
      %404 = sbr.rel (0) target = $region25
    $region24: #{tpu_custom_call.1} parent=1 // pred_region
      %s406 = ssub.s32 16, 16
      %407 = vsyncadd [#allocation4], %s406
      %s409 = sshll.u32 [#allocation5], 4
      %s410 = int_to_ptr.vmem [resolvable:$true] %s409
      %412 = dma.vmem_to_hbm [thread:$0]  %s410, 16, %s4, [#allocation4]
    $region25: #{tpu_custom_call.1} parent=1 // pred_fallthru
      _
    // Predicated region
    $region26: #{tpu_custom_call.1} parent=1 // pred_check
      _
    $region27: #{tpu_custom_call.1} parent=1 // pred_check_branch
      %414 = sbr.rel (0) target = $region29
    $region28: #{tpu_custom_call.1} parent=1 // pred_region
      %415 = dma.done [#allocation4], 16
    $region29: #{tpu_custom_call.1} parent=1 // pred_fallthru
      _
    %416 = vsyncpa [#allocation3], 1
    %417 = vsyncpa [#allocation4], 1

</llo_original>
